<compile_context>
chip_gen: v7x
topology: tpu7x:2x2x1
jax: 0.10.0
libtpu: 0.0.40
codegen_flags: <defaults>
</compile_context>

<pallas_src>
import functools

import jax
import jax.numpy as jnp
from jax.experimental import pallas as pl
from jax.experimental.pallas import tpu as pltpu


class ForwardMode:
    SUPERVISED_TRAIN = 0
    SUPERVISED_INFERENCE = 1
    PROPOSALS_EXTRACTION = 2
    DISCOVERY_FEATURE_EXTRACTION = 3
    DISCOVERY_CLASSIFIER = 4
    DISCOVERY_GT_CLASS_PREDICTIONS_EXTRACTION = 5
    DISCOVERY_INFERENCE = 6


def _round_up(x, m):
    return ((x + m - 1) // m) * m


def _cdiv(a, b):
    return -(-a // b)


def _vmem_capacity_bytes():
    try:
        return int(pltpu.get_tpu_info().vmem_capacity_bytes)
    except Exception:
        return 64 << 20  # conservative: v7x per-TensorCore VMEM


def _spec(shape, index_map, buffer_count=None):
    """BlockSpec with optional explicit buffer count (falls back gracefully)."""
    if buffer_count is not None:
        try:
            return pl.BlockSpec(shape, index_map,
                                pipeline_mode=pl.Buffered(buffer_count))
        except (TypeError, AttributeError):
            pass
    return pl.BlockSpec(shape, index_map)


# --------------------------------------------------------------------------
# One-time classifier prep (cache this on the model, once per weight update):
#   W_n  = W / ||W_col||_2   (bf16, C zero-padded to a multiple of 128)
#   bias = f32, zero-padded to the same width
# --------------------------------------------------------------------------
def prepare_discovery_classifier(weight_dc, bias_c, *, eps=1e-12):
    d, c = weight_dc.shape
    assert bias_c.shape == (1, c)
    w32 = weight_dc.astype(jnp.float32)
    inv_wn = jax.lax.rsqrt(jnp.sum(w32 * w32, axis=0, keepdims=True) + eps)
    wn = (w32 * inv_wn).astype(jnp.bfloat16)                       # [D, C]
    bias = bias_c.astype(jnp.float32)                               # [1, C]
    c_pad = _round_up(c, 128)
    if c_pad != c:
        wn = jnp.pad(wn, ((0, 0), (0, c_pad - c)))
        bias = jnp.pad(bias, ((0, 0), (0, c_pad - c)))
    return wn, bias, c


# --------------------------------------------------------------------------
# Pallas kernel: fused discovery-classifier forward
#   logits = (x / ||x||_2) @ W_n * (1/temperature) + bias
# Row normalization in f32 (VPU + EUP rsqrt), bf16 cast only at the MXU
# boundary, f32 accumulation, temperature scale + bias add in f32 on the
# store path.
# --------------------------------------------------------------------------
def _discovery_classifier_kernel(feat_ref, w_ref, b_ref, out_ref, *, eps, inv_temp):
    x = feat_ref[...].astype(jnp.float32)                           # (TN, D) f32
    inv_xn = jax.lax.rsqrt(jnp.sum(x * x, axis=-1, keepdims=True) + eps)
    xn = (x * inv_xn).astype(jnp.bfloat16)                          # bf16 at MXU

    logits = jnp.dot(xn, w_ref[...], preferred_element_type=jnp.float32)
    out_ref[...] = (logits * inv_temp + b_ref[...]).astype(out_ref.dtype)


def discovery_classifier_forward(features, wn_padded, bias_padded, num_classes, *,
                                 temperature=0.1, eps=1e-12,
                                 tile_n=256, tile_c=1024,
                                 out_dtype=jnp.float32):
    """features: [N, D]; wn_padded: [D, Cp] bf16; bias_padded: [1, Cp] f32.

    Returns logits [N, num_classes] in out_dtype.
    """
    n, d = features.shape
    d2, c_pad = wn_padded.shape
    assert d == d2 and bias_padded.shape == (1, c_pad)
    assert c_pad % 128 == 0 and num_classes <= c_pad

    feat_bytes = jnp.dtype(features.dtype).itemsize
    out_bytes = jnp.dtype(out_dtype).itemsize

    # ---- class-column tiling (lane-dense, multiple of 128, divides c_pad) ---
    tile_c = min(c_pad, max(128, _round_up(tile_c, 128)))
    while c_pad % tile_c != 0:
        tile_c -= 128

    # ---- row tiling: large tiles; keep >=2 row steps for megacore (v7x) -----
    n8 = _round_up(max(n, 1), 8)
    tile_n = max(8, min(_round_up(tile_n, 8), n8))
    if n8 > 8 and _cdiv(n8, tile_n) < 2:
        tile_n = max(8, _round_up(_cdiv(n8, 2), 8))

    # ---- VMEM budget (generation-aware) -------------------------------------
    cap = _vmem_capacity_bytes()
    limit = int(0.75 * cap)

    def _vmem_needed(tn, tc):
        return (2 * tn * d * feat_bytes          # feature tiles (double-buffered)
                + 1 * d * tc * 2                 # weight slab (bf16, single-buffered)
                + 8 * tc * 4                     # bias row (sublane-padded)
                + 2 * tn * tc * out_bytes        # output tiles
                + (4 << 20))                     # headroom

    while _vmem_needed(tile_n, tile_c) > limit and tile_n > 8:
        tile_n = max(8, _round_up(tile_n // 2, 8))
    while _vmem_needed(tile_n, tile_c) > limit and tile_c > 128:
        tile_c = max(128, tile_c - 128)
        while c_pad % tile_c != 0:
            tile_c -= 128

    vmem_limit = int(min(limit, max(_vmem_needed(tile_n, tile_c), 8 << 20)))

    # ---- pad rows to a multiple of the row tile (no f32 upcast here) --------
    n_pad = _round_up(n, tile_n)
    feats = features
    if n_pad != n:
        feats = jnp.pad(feats, ((0, n_pad - n), (0, 0)))

    grid = (n_pad // tile_n, c_pad // tile_c)

    cost = pl.CostEstimate(
        flops=2 * n_pad * d * c_pad,
        transcendentals=n_pad * (c_pad // tile_c),
        bytes_accessed=(n_pad * d * feat_bytes + d * c_pad * 2
                        + c_pad * 4 + n_pad * c_pad * out_bytes),
    )

    kernel = functools.partial(_discovery_classifier_kernel,
                               eps=eps, inv_temp=float(1.0 / temperature))

    out = pl.pallas_call(
        kernel,
        out_shape=jax.ShapeDtypeStruct((n_pad, c_pad), out_dtype),
        grid_spec=pltpu.PrefetchScalarGridSpec(
            num_scalar_prefetch=0,
            grid=grid,
            in_specs=[
                _spec((tile_n, d), lambda i, j: (i, 0)),                   # features
                _spec((d, tile_c), lambda i, j: (0, j), buffer_count=1),   # weights
                _spec((1, tile_c), lambda i, j: (0, j), buffer_count=1),   # bias
            ],
            out_specs=pl.BlockSpec((tile_n, tile_c), lambda i, j: (i, j)),
        ),
        compiler_params=pltpu.CompilerParams(
            dimension_semantics=("parallel", "parallel"),
            vmem_limit_bytes=vmem_limit),
        cost_estimate=cost,
    )(feats, wn_padded, bias_padded)

    # slice off row / class padding
    return out[:n, :num_classes]


# --------------------------------------------------------------------------
# DiscoveryRCNN (JAX / Pallas)
# --------------------------------------------------------------------------
class DiscoveryRCNN:
    def __init__(self, *, feat_dim, num_known_classes, num_novel_classes,
                 key, discovery_nms_thresh=0.6, temperature=0.1, eps=1e-12):
        self.num_known_classes = num_known_classes
        self.num_novel_classes = num_novel_classes
        self.discovery_nms_thresh = discovery_nms_thresh
        self.temperature = temperature
        self.eps = eps
        self._default_forward_mode = None

        k_lab, k_lab_b, k_unlab, k_unlab_b = jax.random.split(key, 4)

        # discovery_model.head_lab: Linear(feat_dim -> num_known_classes + 1)
        # (the +1 background class is removed in remove_bkg_class_from_discovery_model)
        scale = 1.0 / jnp.sqrt(jnp.float32(feat_dim))
        self.head_lab_weight = jax.random.normal(
            k_lab, (num_known_classes + 1, feat_dim), jnp.float32) * scale
        self.head_lab_bias = jax.random.normal(
            k_lab_b, (num_known_classes + 1,), jnp.float32) * 0.01

        # discovery_model.head_unlab: prototypes for novel classes
        self.head_unlab_weight = jax.random.normal(
            k_unlab, (num_novel_classes, feat_dim), jnp.float32) * scale
        self.head_unlab_bias = jax.random.normal(
            k_unlab_b, (num_novel_classes,), jnp.float32) * 0.01

        self.remove_bkg_class_from_discovery_model()
        self._build_combined_classifier()

    # -- mirrors DiscoveryRCNN.remove_bkg_class_from_discovery_model --------
    def remove_bkg_class_from_discovery_model(self):
        self.head_lab_weight = self.head_lab_weight[:-1]   # drop bkg row
        self.head_lab_bias = self.head_lab_bias[:-1]

    def _build_combined_classifier(self):
        # stack labelled + unlabelled heads; store feature-major [D, C]
        w_cd = jnp.concatenate([self.head_lab_weight, self.head_unlab_weight], axis=0)
        self.weight_dc = jnp.asarray(w_cd.T)                                  # [D, C]
        self.bias_c = jnp.concatenate(
            [self.head_lab_bias, self.head_unlab_bias], axis=0)[None, :]      # [1, C]
        # Cache the prepped (normalized, bf16, lane-padded) classifier ONCE per
        # weight update so the per-call path is just the Pallas kernel.
        self._wn_padded, self._bias_padded, self._num_classes = (
            prepare_discovery_classifier(self.weight_dc, self.bias_c, eps=self.eps))

    # -- forward dispatch ----------------------------------------------------
    def forward(self, x, mode=None):
        if mode is None:
            if self._default_forward_mode is not None:
                mode = self._default_forward_mode
            else:
                raise ValueError(
                    "Forward mode must be specified or the default one must be set")
        if mode == ForwardMode.DISCOVERY_CLASSIFIER:
            return self._forward_discovery_classifier(x)
        elif mode in (ForwardMode.SUPERVISED_TRAIN,
                      ForwardMode.SUPERVISED_INFERENCE,
                      ForwardMode.PROPOSALS_EXTRACTION,
                      ForwardMode.DISCOVERY_FEATURE_EXTRACTION,
                      ForwardMode.DISCOVERY_GT_CLASS_PREDICTIONS_EXTRACTION,
                      ForwardMode.DISCOVERY_INFERENCE):
            # TODO(synk): these modes delegate to full detectron2 GeneralizedRCNN
            # pipelines (ResNet-FPN backbone, RPN, ROI heads, NMS) whose
            # definitions are external to this module; no clean Pallas equivalent.
            raise NotImplementedError(
                f"Forward mode {mode} requires the full RCNN pipeline")
        else:
            raise ValueError(f"Unknown forward mode: {mode}")

    __call__ = forward

    def _forward_discovery_classifier(self, features):
        # features: [N, D] ROI feature vectors -> logits [N, K + U]
        return discovery_classifier_forward(
            features, self._wn_padded, self._bias_padded, self._num_classes,
            temperature=self.temperature, eps=self.eps)

    def set_default_forward_mode(self, mode):
        self._default_forward_mode = mode

    def remove_default_forward_mode(self):
        self._default_forward_mode = None


# --------------------------------------------------------------------------
if __name__ == "__main__":
    key = jax.random.PRNGKey(0)
    k_model, k_feat = jax.random.split(key)

    FEAT_DIM = 64          # ROI box-head feature dim (small synthetic)
    NUM_KNOWN = 8          # known classes (bkg row is created then removed)
    NUM_NOVEL = 16         # novel / discovery classes
    N_ROIS = 37            # number of ROI features (non-multiple of 8 on purpose)
    TEMPERATURE = 0.1
    EPS = 1e-12

    model = DiscoveryRCNN(feat_dim=FEAT_DIM,
                          num_known_classes=NUM_KNOWN,
                          num_novel_classes=NUM_NOVEL,
                          key=k_model,
                          temperature=TEMPERATURE,
                          eps=EPS)
    model.set_default_forward_mode(ForwardMode.DISCOVERY_CLASSIFIER)

    features = jax.random.normal(k_feat, (N_ROIS, FEAT_DIM), jnp.float32)

    logits = model(features)                      # Pallas kernel
    logits = jax.block_until_ready(logits)

    # reference check in plain JAX (same bf16-at-the-matmul recipe; the
    # 1/temperature scale is applied in f32 post-matmul, as in the kernel)
    inv_xn = jax.lax.rsqrt(jnp.sum(features ** 2, axis=-1, keepdims=True) + EPS)
    xn = (features * inv_xn).astype(jnp.bfloat16)
    inv_wn = jax.lax.rsqrt(
        jnp.sum(model.weight_dc ** 2, axis=0, keepdims=True) + EPS)
    wn = (model.weight_dc * inv_wn).astype(jnp.bfloat16)
    ref = (jnp.dot(xn, wn, preferred_element_type=jnp.float32)
           * (1.0 / TEMPERATURE) + model.bias_c)

    assert logits.shape == (N_ROIS, NUM_KNOWN + NUM_NOVEL)
    assert bool(jnp.all(jnp.isfinite(logits)))
    assert jnp.allclose(logits, ref, atol=3e-2, rtol=1e-2), (
        float(jnp.max(jnp.abs(logits - ref))))

    print("KERNEL_OK")
</pallas_src>

<mosaic_0001>
module attributes {stable_mosaic.version = 11 : i64} {
  func.func @_discovery_classifier_kernel(%arg0: i32, %arg1: i32, %arg2: memref<24x64xf32, #tpu.memory_space<vmem>>, %arg3: memref<64x128xbf16, #tpu.memory_space<vmem>>, %arg4: memref<1x128xf32, #tpu.memory_space<vmem>>, %arg5: memref<24x128xf32, #tpu.memory_space<vmem>>) attributes {dimension_semantics = [#tpu.dimension_semantics<parallel>, #tpu.dimension_semantics<parallel>], iteration_bounds = array<i64: 2, 1>, scalar_prefetch = 0 : i64, scratch_operands = 0 : i64, tpu.core_type = #tpu.core_type<tc>, window_params = [{transform_indices = @transform_0, window_bounds = array<i64: 24, 64>}, {pipeline_mode = #tpu.pipeline_mode<synchronous>, transform_indices = @transform_1, window_bounds = array<i64: 64, 128>}, {pipeline_mode = #tpu.pipeline_mode<synchronous>, transform_indices = @transform_2, window_bounds = array<i64: 1, 128>}, {transform_indices = @transform_3, window_bounds = array<i64: 24, 128>}]} {
    %c0 = arith.constant 0 : index
    %c0_0 = arith.constant 0 : index
    %0 = vector.load %arg2[%c0, %c0_0] : memref<24x64xf32, #tpu.memory_space<vmem>>, vector<24x64xf32>
    %1 = arith.mulf %0, %0 : vector<24x64xf32>
    %cst = arith.constant dense<0.000000e+00> : vector<24xf32>
    %2 = vector.multi_reduction <add>, %1, %cst [1] : vector<24x64xf32> to vector<24xf32>
    %3 = vector.shape_cast %2 : vector<24xf32> to vector<24x1xf32>
    %cst_1 = arith.constant 9.99999996E-13 : f32
    %4 = vector.broadcast %cst_1 : f32 to vector<24x1xf32>
    %5 = arith.addf %3, %4 : vector<24x1xf32>
    %6 = math.rsqrt %5 : vector<24x1xf32>
    %7 = vector.broadcast %6 : vector<24x1xf32> to vector<24x64xf32>
    %8 = arith.mulf %0, %7 : vector<24x64xf32>
    %9 = arith.truncf %8 : vector<24x64xf32> to vector<24x64xbf16>
    %c0_2 = arith.constant 0 : index
    %c0_3 = arith.constant 0 : index
    %10 = vector.load %arg3[%c0_2, %c0_3] : memref<64x128xbf16, #tpu.memory_space<vmem>>, vector<64x128xbf16>
    %cst_4 = arith.constant dense<0.000000e+00> : vector<24x128xf32>
    %11 = tpu.matmul %9, %10, %cst_4 {dimension_numbers = #tpu.dot_dimension_numbers<[1], [0], [0], [1], [0, 0, 1, 1], [], []>} : vector<24x64xbf16>, vector<64x128xbf16>, vector<24x128xf32> -> vector<24x128xf32>
    %cst_5 = arith.constant 1.000000e+01 : f32
    %12 = vector.broadcast %cst_5 : f32 to vector<24x128xf32>
    %13 = arith.mulf %11, %12 : vector<24x128xf32>
    %c0_6 = arith.constant 0 : index
    %c0_7 = arith.constant 0 : index
    %14 = vector.load %arg4[%c0_6, %c0_7] : memref<1x128xf32, #tpu.memory_space<vmem>>, vector<1x128xf32>
    %15 = vector.broadcast %14 : vector<1x128xf32> to vector<24x128xf32>
    %16 = arith.addf %13, %15 : vector<24x128xf32>
    %c0_8 = arith.constant 0 : index
    %c0_9 = arith.constant 0 : index
    %17 = vector.load %arg5[%c0_8, %c0_9] : memref<24x128xf32, #tpu.memory_space<vmem>>, vector<24x128xf32>
    tpu.vector_store %arg5[%c0_8, %c0_9], %16 {strides = array<i32>} : memref<24x128xf32, #tpu.memory_space<vmem>>, vector<24x128xf32>,
    return
  }
  func.func @transform_0(%arg0: i32, %arg1: i32) -> (i32, i32) {
    %c0_i32 = arith.constant 0 : i32
    %c0_i32_0 = arith.constant 0 : i32
    return %arg0, %c0_i32 : i32, i32
  }
  func.func @transform_1(%arg0: i32, %arg1: i32) -> (i32, i32) {
    %c0_i32 = arith.constant 0 : i32
    %c0_i32_0 = arith.constant 0 : i32
    return %c0_i32, %arg1 : i32, i32
  }
  func.func @transform_2(%arg0: i32, %arg1: i32) -> (i32, i32) {
    %c0_i32 = arith.constant 0 : i32
    %c0_i32_0 = arith.constant 0 : i32
    return %c0_i32, %arg1 : i32, i32
  }
  func.func @transform_3(%arg0: i32, %arg1: i32) -> (i32, i32) {
    %c0_i32 = arith.constant 0 : i32
    return %arg0, %arg1 : i32, i32
  }
}

</mosaic_0001>

<llo_original>
// kernel: tpu_custom_call.1
$region0: #{tpu_custom_call.1}
  #allocation0 [shape = 'u32[]', space=smem, size = 0x4, offset = 0x4, fixed_abs, tag = 'smem constant byte address 0x4 - core index']
  #allocation1 [shape = 'u32[144,128]{1,0:T(1,128)}', space=vmem, size = 0x12000, scoped, tag = 'internal scratch']
  %s0 = inlined_call_operand.hbm [shape: f32[48,64], index: 0, kind: input, shape index: {}]
  %s1 = inlined_call_operand.hbm [shape: bf16[64,128], index: 1, kind: input, shape index: {}]
  %s2 = inlined_call_operand.vmem [shape: f32[1,128], index: 2, kind: input, shape index: {}]
  %s3 = inlined_call_operand.hbm [shape: f32[48,128], index: 3, kind: output, shape index: {}]
  %s4 = sld [smem:[#allocation0]]
  $region53: #{tpu_custom_call.1} parent=0
    _
  %s6 = ssub.s32 1, %s4
  %s7 = scalar_select 0, %s6, %s4
  $region1: #{tpu_custom_call.1} parent=0
    #allocation2 [shape = 'u8[24576]{0}', space=vmem, size = 0x6000, scoped, tag = 'input window, operand 0']
    #allocation3 [shape = 's32[2]{0}', space=sflag, size = 0x8, scoped, tag = 'scoped memory for tpu_custom_call.1']
    #allocation4 [shape = 's32[2]{0}', space=sflag, size = 0x8, scoped, tag = 'scoped memory for tpu_custom_call.1']
    #allocation5 [shape = 'u8[16384]{0}', space=vmem, size = 0x4000, scoped, tag = 'input window, operand 1, single buffered']
    #allocation6 [shape = 's32[1]{0}', space=sflag, size = 0x4, scoped, tag = 'scoped memory for tpu_custom_call.1']
    #allocation7 [shape = 'u8[24576]{0}', space=vmem, size = 0x6000, scoped, tag = 'output window, operand 0']
    %8 = vsyncpa [#allocation3], 0
    %s9 = scalar_lea.sflag [#allocation3], 1
    %10 = vsyncpa %s9, 0
    %11 = vsyncpa [#allocation6], 0
    %12 = vsyncpa [#allocation4], 0
    %s13 = scalar_lea.sflag [#allocation4], 1
    %14 = vsyncpa %s13, 0
    loop: start=0, step=1, limit=4
    $region2: #{tpu_custom_call.1} parent=1 // loop_pre_header
      _
    $region3: #{tpu_custom_call.1} parent=1 // loop_header
      %s16 = sphi 0, %s20
      %p17 = scmp.ge.s32.totalorder %s16, 4
      %s23 = sphi 0, %s35
      %s24 = sphi 0, %s31
      %s25 = sphi 0, %s23
      %s26 = sphi 0, %s24
      %s27 = sphi 0, %s25
      %s28 = sphi 0, %s26
      %s38 = sphi 0, %s40
      %s41 = sphi 0, %s38
      %s42 = sphi 0, %s41
      %s58 = sphi 0, %s42
      %s64 = sphi 0, %s66
      %s67 = sphi 0, %s64
      %s68 = sphi 0, %s67
      %s84 = sphi 0, %s68
      %s90 = sphi 0, %s92
      %s93 = sphi 0, %s90
      %s94 = sphi 0, %s93
      %s110 = sphi 0, %s94
      %s118 = sphi 0, %s120
      %s121 = sphi 0, %s118
      %s122 = sphi 0, %s121
      %s138 = sphi 0, %s122
    $region4: #{tpu_custom_call.1} parent=1 // loop_header_branch
      %19 = sbr.rel (%p17) target = $region8
    $region5: #{tpu_custom_call.1} parent=1 // loop_body
      %s21 = ssub.s32 %s16, 1
      %s22 = ssub.s32 %s16, 2
      %s29 = sadd.s32 1, %s24
      %p30 = scmp.ge.s32.totalorder %s29, 1
      %s31 = scalar_select %p30, 0, %s29
      %s32 = sadd.s32 1, %s23
      %s33 = scalar_select %p30, %s32, %s23
      %p34 = scmp.ge.s32.totalorder %s33, 2
      %s35 = scalar_select %p34, 0, %s33
      %s36 = ssub.s32 %s23, %s35
      %p37 = scmp.eq.s32.totalorder %s36, 0
      %s39 = sadd.s32 %s38, 1
      %s40 = scalar_select %p37, %s38, %s39
      %p43 = pneg %p37
      %p44 = scmp.eq.s32.totalorder %s16, 1
      %p45 = por %p43, %p44
      %p46 = scmp.ne.s32.totalorder %s38, %s41
      %p47 = scmp.eq.s32.totalorder %s16, 0
      %p48 = por %p46, %p47
      %p49 = scmp.ne.s32.totalorder %s38, %s41
      %p50 = scmp.eq.s32.totalorder %s21, 1
      %p51 = por %p49, %p50
      %p52 = scmp.ne.s32.totalorder %s41, %s42
      %p53 = scmp.eq.s32.totalorder %s21, 0
      %p54 = por %p52, %p53
      %p55 = scmp.ne.s32.totalorder %s41, %s42
      %p56 = scmp.eq.s32.totalorder %s22, 1
      %p57 = por %p55, %p56
      %p59 = scmp.ne.s32.totalorder %s42, %s58
      %p60 = scmp.eq.s32.totalorder %s22, 0
      %p61 = por %p59, %p60
      %s62 = ssub.s32 %s24, %s31
      %p63 = scmp.eq.s32.totalorder %s62, 0
      %s65 = sadd.s32 %s64, 1
      %s66 = scalar_select %p63, %s64, %s65
      %p69 = pneg %p63
      %p70 = scmp.eq.s32.totalorder %s16, 1
      %p71 = por %p69, %p70
      %p72 = scmp.ne.s32.totalorder %s64, %s67
      %p73 = scmp.eq.s32.totalorder %s16, 0
      %p74 = por %p72, %p73
      %p75 = scmp.ne.s32.totalorder %s64, %s67
      %p76 = scmp.eq.s32.totalorder %s21, 1
      %p77 = por %p75, %p76
      %p78 = scmp.ne.s32.totalorder %s67, %s68
      %p79 = scmp.eq.s32.totalorder %s21, 0
      %p80 = por %p78, %p79
      %p81 = scmp.ne.s32.totalorder %s67, %s68
      %p82 = scmp.eq.s32.totalorder %s22, 1
      %p83 = por %p81, %p82
      %p85 = scmp.ne.s32.totalorder %s68, %s84
      %p86 = scmp.eq.s32.totalorder %s22, 0
      %p87 = por %p85, %p86
      %s88 = ssub.s32 %s24, %s31
      %p89 = scmp.eq.s32.totalorder %s88, 0
      %s91 = sadd.s32 %s90, 1
      %s92 = scalar_select %p89, %s90, %s91
      %p95 = pneg %p89
      %p96 = scmp.eq.s32.totalorder %s16, 1
      %p97 = por %p95, %p96
      %p98 = scmp.ne.s32.totalorder %s90, %s93
      %p99 = scmp.eq.s32.totalorder %s16, 0
      %p100 = por %p98, %p99
      %p101 = scmp.ne.s32.totalorder %s90, %s93
      %p102 = scmp.eq.s32.totalorder %s21, 1
      %p103 = por %p101, %p102
      %p104 = scmp.ne.s32.totalorder %s93, %s94
      %p105 = scmp.eq.s32.totalorder %s21, 0
      %p106 = por %p104, %p105
      %p107 = scmp.ne.s32.totalorder %s93, %s94
      %p108 = scmp.eq.s32.totalorder %s22, 1
      %p109 = por %p107, %p108
      %p111 = scmp.ne.s32.totalorder %s94, %s110
      %p112 = scmp.eq.s32.totalorder %s22, 0
      %p113 = por %p111, %p112
      %s114 = ssub.s32 %s23, %s35
      %s115 = ssub.s32 %s24, %s31
      %s116 = sor.u32 %s114, %s115
      %p117 = scmp.eq.s32.totalorder %s116, 0
      %s119 = sadd.s32 %s118, 1
      %s120 = scalar_select %p117, %s118, %s119
      %p123 = pneg %p117
      %p124 = scmp.eq.s32.totalorder %s16, 1
      %p125 = por %p123, %p124
      %p126 = scmp.ne.s32.totalorder %s118, %s121
      %p127 = scmp.eq.s32.totalorder %s16, 0
      %p128 = por %p126, %p127
      %p129 = scmp.ne.s32.totalorder %s118, %s121
      %p130 = scmp.eq.s32.totalorder %s21, 1
      %p131 = por %p129, %p130
      %p132 = scmp.ne.s32.totalorder %s121, %s122
      %p133 = scmp.eq.s32.totalorder %s21, 0
      %p134 = por %p132, %p133
      %p135 = scmp.ne.s32.totalorder %s121, %s122
      %p136 = scmp.eq.s32.totalorder %s22, 1
      %p137 = por %p135, %p136
      %p139 = scmp.ne.s32.totalorder %s122, %s138
      %p140 = scmp.eq.s32.totalorder %s22, 0
      %p141 = por %p139, %p140
      %p142 = scmp.le.s32.totalorder 1, %s16
      %p143 = scmp.lt.s32.totalorder %s16, 3
      %p144 = pnand %p142, %p143
      %p145 = pneg %p144
      // Predicated region
      $region9: #{tpu_custom_call.1} parent=5 // pred_check
        _
      $region10: #{tpu_custom_call.1} parent=5 // pred_check_branch
        %147 = sbr.rel (%p144) target = $region12
      $region11: #{tpu_custom_call.1} parent=5 // pred_region
        %s148 = ssub.s32 %s16, 1
        // Predicated region
        $region13: #{tpu_custom_call.1} parent=11 // pred_check
          %p149 = pneg %p80
        $region14: #{tpu_custom_call.1} parent=11 // pred_check_branch
          %151 = sbr.rel (%p149) target = $region16
        $region15: #{tpu_custom_call.1} parent=11 // pred_region
          %s153 = ssub.s32 512, 512
          %154 = vsyncadd [#allocation6], %s153
          %s155 = smul.addr %s26, 64
          %s156 = scalar_lea.hbm %s1, %s155
          %s157 = sshll.u32 [#allocation5], 4
          %s158 = int_to_ptr.vmem [resolvable:$true] %s157
          %163 = dma.hbm_to_vmem [thread:$0]  %s156, 512, %s158, [#allocation6], 64, 64, 4
        $region16: #{tpu_custom_call.1} parent=11 // pred_fallthru
          _
        // Predicated region
        $region17: #{tpu_custom_call.1} parent=11 // pred_check
          %p164 = pneg %p106
        $region18: #{tpu_custom_call.1} parent=11 // pred_check_branch
          %166 = sbr.rel (%p164) target = $region20
        $region19: #{tpu_custom_call.1} parent=11 // pred_region
          %p167 = scmp.lt.s32.totalorder %s26, 0
          %s168 = scalar_select %p167, %s26, 0
          %s169 = scalar_lea.vmem %s2, %s168
        $region20: #{tpu_custom_call.1} parent=11 // pred_fallthru
          _
      $region12: #{tpu_custom_call.1} parent=5 // pred_fallthru
        _
      %p170 = scmp.lt.s32.totalorder %s16, 2
      // Predicated region
      $region21: #{tpu_custom_call.1} parent=5 // pred_check
        %p171 = pneg %p170
      $region22: #{tpu_custom_call.1} parent=5 // pred_check_branch
        %173 = sbr.rel (%p171) target = $region24
      $region23: #{tpu_custom_call.1} parent=5 // pred_region
        // Predicated region
        $region25: #{tpu_custom_call.1} parent=23 // pred_check
          %p174 = pneg %p48
        $region26: #{tpu_custom_call.1} parent=23 // pred_check_branch
          %176 = sbr.rel (%p174) target = $region28
        $region27: #{tpu_custom_call.1} parent=23 // pred_region
          %s177 = sand.u32 %s38, 1
          %s178 = scalar_lea.sflag [#allocation3], %s177
          %s179 = sand.u32 %s38, 1
          %s180 = smul.addr %s179, 24
          %s181 = scalar_lea.vmem [#allocation2], %s180
          %s182 = smul.u32 3, %s23
          %s184 = ssub.s32 384, 384
          %185 = vsyncadd %s178, %s184
          %s186 = smul.addr %s182, 128
          %s187 = scalar_lea.hbm %s0, %s186
          %s188 = sshll.u32 %s181, 4
          %s189 = int_to_ptr.vmem [resolvable:$true] %s188
          %194 = dma.hbm_to_vmem [thread:$0]  %s187, 384, %s189, %s178, 128, 128, 8
        $region28: #{tpu_custom_call.1} parent=23 // pred_fallthru
          _
      $region24: #{tpu_custom_call.1} parent=5 // pred_fallthru
        _
      %p195 = scmp.le.s32.totalorder 1, %s16
      %p196 = scmp.lt.s32.totalorder %s16, 3
      %p197 = pnand %p195, %p196
      %p198 = pneg %p197
      // Predicated region
      $region29: #{tpu_custom_call.1} parent=5 // pred_check
        _
      $region30: #{tpu_custom_call.1} parent=5 // pred_check_branch
        %200 = sbr.rel (%p197) target = $region32
      $region31: #{tpu_custom_call.1} parent=5 // pred_region
        %s201 = ssub.s32 %s16, 1
        %s202 = sand.u32 %s41, 1
        %s203 = scalar_lea.sflag [#allocation3], %s202
        %s204 = sand.u32 %s41, 1
        %s205 = smul.addr %s204, 24
        %s206 = scalar_lea.vmem [#allocation2], %s205
        // Predicated region
        $region33: #{tpu_custom_call.1} parent=31 // pred_check
          %p207 = pneg %p54
        $region34: #{tpu_custom_call.1} parent=31 // pred_check_branch
          %209 = sbr.rel (%p207) target = $region36
        $region35: #{tpu_custom_call.1} parent=31 // pred_region
          %210 = dma.done %s203, 384
        $region36: #{tpu_custom_call.1} parent=31 // pred_fallthru
          _
        // Predicated region
        $region37: #{tpu_custom_call.1} parent=31 // pred_check
          %p211 = pneg %p80
        $region38: #{tpu_custom_call.1} parent=31 // pred_check_branch
          %213 = sbr.rel (%p211) target = $region40
        $region39: #{tpu_custom_call.1} parent=31 // pred_region
          %214 = dma.done [#allocation6], 512
        $region40: #{tpu_custom_call.1} parent=31 // pred_fallthru
          _
        %s215 = sand.u32 %s41, 1
        %s216 = scalar_lea.sflag [#allocation3], %s215
        %s217 = sand.u32 %s41, 1
        %s218 = smul.addr %s217, 24
        %s219 = scalar_lea.vmem [#allocation2], %s218
        %p220 = pneg %p54
        %p221 = pneg %p51
        %p222 = pneg %p80
        %p223 = pneg %p77
        %p224 = scmp.lt.s32.totalorder %s26, 0
        %s225 = scalar_select %p224, %s26, 0
        %s226 = scalar_lea.vmem %s2, %s225
        %p227 = pneg %p106
        %p228 = pneg %p103
        %p229 = pneg %p134
        %p230 = pneg %p131
        %s231 = sand.u32 %s121, 1
        %s232 = scalar_lea.sflag [#allocation4], %s231
        %s233 = sand.u32 %s121, 1
        %s234 = smul.addr %s233, 24
        %s235 = scalar_lea.vmem [#allocation7], %s234
        %s236 = smul.u32 3, %s25
        %p237 = scmp.lt.s32.totalorder %s26, 0
        %s238 = scalar_select %p237, %s26, 0
        %s239 = scalar_lea.vmem %s2, %s238
        %s240 = smul.u32 3, %s25
        %v242 = vld [vmem:[%s206] sm:$0xff]
        %v243 = vld [vmem:[%s206 + $0x8] sm:$0xff]
        %v244 = vld [vmem:[%s206 + $0x10] sm:$0xff]
        %v245 = vmul.f32 %v242, %v242
        %v246 = vmul.f32 %v243, %v243
        %v247 = vmul.f32 %v244, %v244
        %vm248 = vcmask 523264
        %v249 = vsel %vm248, %v245, 0.0
        %250 = vadd.xlane.f32.xlu0 %v249
        %v251 = vpop.xlane.xlu0 %250
        %v252 = vsel %vm248, %v246, 0.0
        %253 = vadd.xlane.f32.xlu0 %v252
        %v254 = vpop.xlane.xlu0 %253
        %v255 = vsel %vm248, %v247, 0.0
        %256 = vadd.xlane.f32.xlu0 %v255
        %v257 = vpop.xlane.xlu0 %256
        %v258 = vadd.f32 %v251, 1e-12
        %v259 = vadd.f32 %v254, 1e-12
        %v260 = vadd.f32 %v257, 1e-12
        %v261 = vrsqrt.pop %v258
        %v262 = vrsqrt.pop %v259
        %v263 = vrsqrt.pop %v260
        %v264 = vmul.f32 %v242, %v261
        %v265 = vmul.f32 %v243, %v262
        %v266 = vmul.f32 %v244, %v263
        %v267 = vpack.c.bf16 %v265, %v264
        %v268 = vpack.c.bf16 %v266, %v266
        %v269 = vld [vmem:[#allocation5] sm:$0xf]
        %v270 = vld [vmem:[#allocation5 + $0x4] sm:$0xf]
        %v271 = vld [vmem:[#allocation5 + $0x8] sm:$0xf]
        %v272 = vld [vmem:[#allocation5 + $0xc] sm:$0xf]
        %v273 = vld [vmem:[#allocation5 + $0x10] sm:$0xf]
        %v274 = vld [vmem:[#allocation5 + $0x14] sm:$0xf]
        %v275 = vld [vmem:[#allocation5 + $0x18] sm:$0xf]
        %v276 = vld [vmem:[#allocation5 + $0x1c] sm:$0xf]
        %v285 = vunpack.c.l.b16 %v269
        %v286 = vunpack.c.l.b16 %v270
        %v287 = vunpack.c.l.b16 %v271
        %v288 = vunpack.c.l.b16 %v272
        %v289 = vunpack.c.l.b16 %v273
        %v290 = vunpack.c.l.b16 %v274
        %v291 = vunpack.c.l.b16 %v275
        %v292 = vunpack.c.l.b16 %v276
        %v293 = vpack.c.b16 %v286, %v285
        %v294 = vpack.c.b16 %v288, %v287
        %v295 = vpack.c.b16 %v290, %v289
        %v296 = vpack.c.b16 %v292, %v291
        %v302 = vsel %vm248, %v267, 0
        %v305 = vsel %vm248, %v268, 0
        %307 = vmatprep.subr.bf16.mxu0 0
        %308 = vmatpush1.bf16.msra.mxu0 %v293
        %309 = vmatprep.subr.bf16.mxu0 0
        %310 = vmatpush1.bf16.msra.mxu0 %v294
        %311 = vmatprep.subr.bf16.mxu0 0
        %312 = vmatpush1.bf16.msra.mxu0 %v295
        %313 = vmatprep.subr.bf16.mxu0 0
        %314 = vmatpush1.bf16.msra.mxu0 %v296
        %315 = vmatprep.subr.bf16.mxu0 0
        %316 = vmatpush1.bf16.msra.mxu0 0
        %317 = vmatprep.subr.bf16.mxu0 0
        %318 = vmatpush1.bf16.msra.mxu0 0
        %319 = vmatprep.subr.bf16.mxu0 0
        %320 = vmatpush1.bf16.msra.mxu0 0
        %321 = vmatprep.subr.bf16.mxu0 0
        %322 = vmatpush1.bf16.msra.mxu0 0
        %323 = vmatprep.subr.bf16.mxu0 0
        %324 = vmatpush1.bf16.msra.mxu0 0
        %325 = vmatprep.subr.bf16.mxu0 0
        %326 = vmatpush1.bf16.msra.mxu0 0
        %327 = vmatprep.subr.bf16.mxu0 0
        %328 = vmatpush1.bf16.msra.mxu0 0
        %329 = vmatprep.subr.bf16.mxu0 0
        %330 = vmatpush1.bf16.msra.mxu0 0
        %331 = vmatprep.subr.bf16.mxu0 0
        %332 = vmatpush1.bf16.msra.mxu0 0
        %333 = vmatprep.subr.bf16.mxu0 0
        %334 = vmatpush1.bf16.msra.mxu0 0
        %335 = vmatprep.subr.bf16.mxu0 0
        %336 = vmatpush1.bf16.msra.mxu0 0
        %337 = vmatprep.subr.bf16.mxu0 0
        %338 = vmatpush1.bf16.msra.mxu0 0
        %339 = vmatprep.mubr.bf16.mxu0 0
        %340 = vmatmul.mubr.bf16.gmra.mrb[0].mxu0 %v302
        %v341 = vpop.f32.mrb[0].mxu0
        %v342 = vadd.f32 0.0, %v341
        %v343 = vpop.f32.mrb[0].mxu0
        %v344 = vpop.f32.mrb[0].mxu0
        %v345 = vadd.f32 0.0, %v344
        %v346 = vpop.f32.mrb[0].mxu0
        %347 = vmatprep.mubr.bf16.mxu0 0
        %348 = vmatmul.mubr.bf16.gmra.mrb[0].mxu0 %v305
        %v349 = vpop.f32.mrb[0].mxu0
        %v350 = vadd.f32 0.0, %v349
        %v351 = vpop.f32.mrb[0].mxu0
        %v352 = vpop.f32.mrb[0].mxu0
        %v353 = vpop.f32.mrb[0].mxu0
        %354 = vdwg.mxu0
        %v355 = vmul.f32 %v342, 10.0
        %v356 = vmul.f32 %v345, 10.0
        %v357 = vmul.f32 %v350, 10.0
        %v358 = vld [vmem:[%s239] sm:$0x1]
        %v360 = vlaneseq
        %v361 = vshrl.u32 %v360, 7
        %v362 = vsub.s32 0, %v361
        %v363 = vrot.slane %v358, %v362
        %v365 = vadd.f32 %v355, %v363
        %v366 = vadd.f32 %v356, %v363
        %v367 = vadd.f32 %v357, %v363
        %368 = vst [vmem:[%s235] sm:$0xff] %v365
        %369 = vst [vmem:[%s235 + $0x8] sm:$0xff] %v366
        %370 = vst [vmem:[%s235 + $0x10] sm:$0xff] %v367
        %s371 = sand.u32 %s121, 1
        %s372 = scalar_lea.sflag [#allocation4], %s371
        %s373 = sand.u32 %s121, 1
        %s374 = smul.addr %s373, 24
        %s375 = scalar_lea.vmem [#allocation7], %s374
        // Predicated region
        $region41: #{tpu_custom_call.1} parent=31 // pred_check
          %p376 = pneg %p131
        $region42: #{tpu_custom_call.1} parent=31 // pred_check_branch
          %378 = sbr.rel (%p376) target = $region44
        $region43: #{tpu_custom_call.1} parent=31 // pred_region
          %s379 = smul.u32 3, %s25
          %s381 = ssub.s32 384, 384
          %382 = vsyncadd %s372, %s381
          %s383 = sadd.s32 %s26, %s379
          %s384 = smul.addr %s383, 128
          %s385 = scalar_lea.hbm %s3, %s384
          %s386 = sshll.u32 %s375, 4
          %s387 = int_to_ptr.vmem [resolvable:$true] %s386
          %392 = dma.vmem_to_hbm [thread:$0]  %s387, 384, %s385, %s372, 128, 128, 8
        $region44: #{tpu_custom_call.1} parent=31 // pred_fallthru
          _
      $region32: #{tpu_custom_call.1} parent=5 // pred_fallthru
        _
      %p393 = scmp.le.s32.totalorder 2, %s16
      // Predicated region
      $region45: #{tpu_custom_call.1} parent=5 // pred_check
        %p394 = pneg %p393
      $region46: #{tpu_custom_call.1} parent=5 // pred_check_branch
        %396 = sbr.rel (%p394) target = $region48
      $region47: #{tpu_custom_call.1} parent=5 // pred_region
        %s397 = ssub.s32 %s16, 2
        // Predicated region
        $region49: #{tpu_custom_call.1} parent=47 // pred_check
          %p398 = pneg %p137
        $region50: #{tpu_custom_call.1} parent=47 // pred_check_branch
          %400 = sbr.rel (%p398) target = $region52
        $region51: #{tpu_custom_call.1} parent=47 // pred_region
          %s401 = sand.u32 %s122, 1
          %s402 = scalar_lea.sflag [#allocation4], %s401
          %s403 = sand.u32 %s122, 1
          %s404 = smul.addr %s403, 24
          %s405 = scalar_lea.vmem [#allocation7], %s404
          %406 = dma.done %s402, 384
        $region52: #{tpu_custom_call.1} parent=47 // pred_fallthru
          _
      $region48: #{tpu_custom_call.1} parent=5 // pred_fallthru
        _
    $region6: #{tpu_custom_call.1} parent=1 // loop_footer
      %s20 = sadd.s32 1, %s16
    $region7: #{tpu_custom_call.1} parent=1 // loop_footer_branch
      %15 = sbr.rel target = $region3
    $region8: #{tpu_custom_call.1} parent=1 // loop_exit
      _
    %407 = vsyncpa [#allocation3], 1
    %s408 = scalar_lea.sflag [#allocation3], 1
    %409 = vsyncpa %s408, 1
    %410 = vsyncpa [#allocation6], 1
    %411 = vsyncpa [#allocation4], 1
    %s412 = scalar_lea.sflag [#allocation4], 1
    %413 = vsyncpa %s412, 1

</llo_original>
